<compile_context>
chip_gen: v7x
topology: tpu7x:2x2x1
jax: 0.10.0
libtpu: 0.0.40
codegen_flags: <defaults>
</compile_context>

<pallas_src>
import math
import functools

import jax
import jax.numpy as jnp
from jax import lax
from jax.experimental import pallas as pl
from jax.experimental.pallas import tpu as pltpu

_LANE = 128


def _round_up(n, m):
    return ((n + m - 1) // m) * m


def _pad_lanes(x, width):
    pad = width - x.shape[-1]
    if pad == 0:
        return x
    return jnp.pad(x, ((0, 0), (0, pad)))


# =============================================================================
# Kernel 1: DRRAveStateRepresentation dense state computation.
# =============================================================================
def _drr_state_kernel(u_ref, items_ref, hist_ref, w_ref, cat_ref,
                      sui_ref, sch_ref, sach_ref, suc_ref):
    # u_ref (1, Dp), items_ref (N, Dp), hist_ref (M, Dp), w_ref (M, 1),
    # cat_ref (1, Dp).  Dp = 128 (lane-dense, zero-padded past D=100).
    u = u_ref[...]
    items = items_ref[...]

    # Sui: user embedding * each candidate-item embedding (sublane broadcast).
    sui_ref[...] = (u * items).astype(sui_ref.dtype)

    # Sch: history embeddings weighted by mask[i] * (1 - discount_rate) (lane bcast).
    hw = hist_ref[...] * w_ref[...]
    sch_ref[...] = hw.astype(sch_ref.dtype)

    # SAch: softmax(Hw @ E^T, axis=-1) @ E  (no scaling, matching the torch code).
    # dot_general contracts the (padded) embedding axis of both operands; the
    # zero pad lanes contribute nothing, so the result is exact.
    dn = (((1,), (1,)), ((), ()))
    s = lax.dot_general(hw, items, dn, preferred_element_type=jnp.float32)  # (M, N)
    s = s - jnp.max(s, axis=-1, keepdims=True)
    p = jnp.exp(s)
    p = p * pl.reciprocal(jnp.sum(p, axis=-1, keepdims=True), approx=False)
    sach_ref[...] = jnp.dot(p, items,
                            preferred_element_type=jnp.float32).astype(sach_ref.dtype)

    # Suc: user embedding * category embedding.
    suc_ref[...] = (u * cat_ref[...]).astype(suc_ref.dtype)


def _drr_state_pallas(user_emb, item_embs, hist_embs, hist_weights, cat_emb):
    n_items, dim = item_embs.shape
    m_hist = hist_embs.shape[0]
    dt = user_emb.dtype
    d_pad = _round_up(dim, _LANE)

    # Wrapper-side layout plumbing: zero-pad the embedding dim to 128 lanes so
    # every kernel store is a full-width unmasked vst.
    u_p = _pad_lanes(user_emb, d_pad)
    items_p = _pad_lanes(item_embs, d_pad)
    hist_p = _pad_lanes(hist_embs, d_pad)
    cat_p = _pad_lanes(cat_emb, d_pad)

    vmem = pl.BlockSpec(memory_space=pltpu.MemorySpace.VMEM)
    sui, sch, sach, suc = pl.pallas_call(
        _drr_state_kernel,
        out_shape=(jax.ShapeDtypeStruct((n_items, d_pad), dt),   # Sui rows
                   jax.ShapeDtypeStruct((m_hist, d_pad), dt),    # Sch rows
                   jax.ShapeDtypeStruct((m_hist, d_pad), dt),    # SAch rows
                   jax.ShapeDtypeStruct((1, d_pad), dt)),        # Suc
        in_specs=[vmem] * 5,
        out_specs=(vmem, vmem, vmem, vmem),
    )(u_p, items_p, hist_p, hist_weights, cat_p)
    return sui[:, :dim], sch[:, :dim], sach[:, :dim], suc[:, :dim]


def _assemble_state(sui, sch, sach, suc, preds, flag_idx):
    # Host/XLA-side flatten + concat, mirroring the State_compare_flag branches.
    Sui = sui.reshape(1, -1)
    Sch = sch.reshape(1, -1)
    SAch = sach.reshape(1, -1)
    Suc = suc.reshape(1, -1)
    pieces = {
        0: (Sui,), 1: (Sch,), 2: (SAch,),
        3: (Sui, Sch), 4: (Sui, SAch), 5: (Sui, Suc),
        6: (Sch, Suc), 7: (SAch, Suc),
        8: (Sui, Sch, Suc), 9: (Sui, SAch, Suc),
    }[flag_idx]
    return jnp.concatenate(pieces + (preds,), axis=-1)


def drr_state_representation(user_emb, item_embs, hist_embs, hist_weights,
                             cat_emb, preds, *, state_flag_idx=9):
    sui, sch, sach, suc = _drr_state_pallas(user_emb, item_embs, hist_embs,
                                            hist_weights, cat_emb)
    return _assemble_state(sui, sch, sach, suc, preds, state_flag_idx)


def _drr_reference(user_emb, item_embs, hist_embs, hist_weights, cat_emb, preds,
                   *, state_flag_idx=9):
    sui = user_emb * item_embs
    hw = hist_embs * hist_weights
    attn = jax.nn.softmax(jnp.matmul(hw, item_embs.T), axis=-1)
    sach = jnp.matmul(attn, item_embs)
    suc = user_emb * cat_emb
    return _assemble_state(sui, hw, sach, suc, preds, state_flag_idx)


# =============================================================================
# Kernel 2: Multi_CrossAttention submodule (hidden=100, all_head=100, heads=5).
# =============================================================================
def _mca_kernel(x_ref, y_ref, wqt_ref, wkt_ref, wvt_ref, wot_ref, bo_ref,
                out_ref, attn_ref, *, num_heads, head_dim, hd_pad, batch, seq):
    # x_ref/y_ref: (B*S, D); wqt/wkt/wvt: (D, heads*hd_pad) head-block layout;
    # wot: (heads*hd_pad, D_pad); bo: (1, D_pad); out_ref: (B*S, D_pad);
    # attn_ref: VMEM scratch (B*S, heads*hd_pad).
    x = x_ref[...]
    y = y_ref[...]

    # Full-batch projections; weights are already transposed and laid out in
    # per-head, 128-lane-aligned column blocks wrapper-side.
    q = jnp.dot(x, wqt_ref[...], preferred_element_type=jnp.float32)   # (BS, Hp)
    k = jnp.dot(x, wkt_ref[...], preferred_element_type=jnp.float32)   # K from x
    v = jnp.dot(y, wvt_ref[...], preferred_element_type=jnp.float32)   # V from y

    # Fold the 1/sqrt(head_dim) softmax scale into q once.
    q = q * (1.0 / math.sqrt(head_dim))

    dn = (((1,), (1,)), ((), ()))   # contract head_dim of both operands (no kh.T)
    for b in range(batch):
        r0 = b * seq
        for h in range(num_heads):
            c0 = h * hd_pad                              # 128-lane aligned block
            qh = q[r0:r0 + seq, c0:c0 + hd_pad]          # (S, hd_pad)
            kh = k[r0:r0 + seq, c0:c0 + hd_pad]
            vh = v[r0:r0 + seq, c0:c0 + hd_pad]
            s = lax.dot_general(qh, kh, dn, preferred_element_type=jnp.float32)  # (S,S)
            s = s - jnp.max(s, axis=-1, keepdims=True)
            p = jnp.exp(s)
            p = p * pl.reciprocal(jnp.sum(p, axis=-1, keepdims=True), approx=False)
            # Lane-aligned, unmasked store of this head's output block.
            attn_ref[r0:r0 + seq, c0:c0 + hd_pad] = jnp.dot(
                p, vh, preferred_element_type=jnp.float32)

    # Output projection into a lane-dense (128-wide padded) buffer.
    out = jnp.dot(attn_ref[...], wot_ref[...], preferred_element_type=jnp.float32)
    out_ref[...] = (out + bo_ref[...]).astype(out_ref.dtype)


def multi_cross_attention(x, y, params, *, num_heads):
    """x, y: (B, S, hidden). params: Wq/Wk/Wv (A, hidden), Wo (hidden, A), bo (hidden,)."""
    B, S, D = x.shape
    A = params["Wq"].shape[0]
    head_dim = A // num_heads
    assert A % num_heads == 0
    BS = B * S
    d_pad = _round_up(D, _LANE)
    hd_pad = _round_up(head_dim, _LANE)      # per-head lane-aligned block width
    a_pad = num_heads * hd_pad

    # Wrapper-side (trace-time) layout plumbing: flatten batch*seq, pre-transpose
    # the weights and lay them out so each head owns a 128-lane-aligned block;
    # pad the output projection to a lane-dense width.
    x2 = x.reshape(BS, D)
    y2 = y.reshape(BS, D)

    def head_block_t(w):
        # w: (A, D)  ->  (D, num_heads*hd_pad), head h in columns [h*hd_pad, ...).
        wt = w.T
        out = jnp.zeros((D, a_pad), x.dtype)
        for h in range(num_heads):
            out = out.at[:, h * hd_pad:h * hd_pad + head_dim].set(
                wt[:, h * head_dim:(h + 1) * head_dim])
        return out

    wqt = head_block_t(params["Wq"])
    wkt = head_block_t(params["Wk"])
    wvt = head_block_t(params["Wv"])

    wo_t = params["Wo"].T                                  # (A, D)
    wot = jnp.zeros((a_pad, d_pad), x.dtype)
    for h in range(num_heads):
        wot = wot.at[h * hd_pad:h * hd_pad + head_dim, :D].set(
            wo_t[h * head_dim:(h + 1) * head_dim, :])
    bo = jnp.zeros((1, d_pad), x.dtype).at[:, :D].set(params["bo"][None, :])

    kernel = functools.partial(_mca_kernel, num_heads=num_heads,
                               head_dim=head_dim, hd_pad=hd_pad,
                               batch=B, seq=S)
    vmem = pl.BlockSpec(memory_space=pltpu.MemorySpace.VMEM)
    out_pad = pl.pallas_call(
        kernel,
        out_shape=jax.ShapeDtypeStruct((BS, d_pad), x.dtype),
        in_specs=[vmem] * 7,
        out_specs=vmem,
        scratch_shapes=[pltpu.VMEM((BS, a_pad), jnp.float32)],
    )(x2, y2, wqt, wkt, wvt, wot, bo)
    return out_pad[:, :D].reshape(B, S, D)


def _mca_reference(x, y, params, *, num_heads):
    B, S, D = x.shape
    A = params["Wq"].shape[0]
    hd = A // num_heads
    q = jnp.einsum("bsd,ad->bsa", x, params["Wq"]).reshape(B, S, num_heads, hd).transpose(0, 2, 1, 3)
    k = jnp.einsum("bsd,ad->bsa", x, params["Wk"]).reshape(B, S, num_heads, hd).transpose(0, 2, 1, 3)
    v = jnp.einsum("bsd,ad->bsa", y, params["Wv"]).reshape(B, S, num_heads, hd).transpose(0, 2, 1, 3)
    s = jnp.einsum("bhqd,bhkd->bhqk", q, k) / math.sqrt(hd)
    p = jax.nn.softmax(s, axis=-1)
    o = jnp.einsum("bhqk,bhkd->bhqd", p, v).transpose(0, 2, 1, 3).reshape(B, S, A)
    return jnp.einsum("bsa,da->bsd", o, params["Wo"]) + params["bo"]


if __name__ == "__main__":
    key = jax.random.PRNGKey(0)
    (k_user, k_recipe, k_cat, k_noise, k_x, k_y,
     k_q, k_k, k_v, k_o, k_b) = jax.random.split(key, 11)

    # ------------------------------------------------------------------
    # DRRAveStateRepresentation state computation.
    # embedding_dim = 100 (module builds Multi_CrossAttention(100, 100, 5)),
    # 10 candidate / history items (module's wav = Conv1d(10, 1, 1)),
    # episode_length = 10.
    # ------------------------------------------------------------------
    D = 100
    N_ITEMS = 10
    M_HIST = 10
    EPISODE_LEN = 10
    NUM_RECIPES = 20
    NUM_CATEGORIES = 6

    recipe_table = 0.3 * jax.random.normal(k_recipe, (NUM_RECIPES, D), jnp.float32)
    category_table = 0.3 * jax.random.normal(k_cat, (NUM_CATEGORIES, D), jnp.float32)
    user_emb = jax.random.normal(k_user, (1, D), jnp.float32)

    # TODO(synk): embedding-id lookups, Counter(global_history) discounting,
    # torch.normal / torch.rand noise, the (dead-code) Bernoulli attention_mask
    # and the `preds` list padding are host-side Python in the original forward;
    # they are reproduced deterministically here and fed to the kernel as inputs.
    item_ids = [1, 3, 5, 7, 9, 11, 13, 15, 17, 19]
    history_ids = [0, 2, 2, 4, 6, 8, 8, 8, 10, 12]
    global_history = [0, 2, 2, 2, 4, 6, 8, 8, 8, 8, 10, 12, 12, 1, 3]
    ratings = [5.0, 4.0, 3.0, 5.0, 2.0, 4.0, 1.0, 3.0, 5.0, 4.0]
    last_category = 3

    rating_mean = sum(ratings) / len(ratings)
    rating_var = sum((r - rating_mean) ** 2 for r in ratings) / (len(ratings) - 1)
    noise = (rating_mean / 5.0
             + rating_var * jax.random.normal(k_noise, (M_HIST,), jnp.float32)) / 5.0
    base_mask = jnp.asarray([(5.0 - r) / 5.0 for r in ratings], jnp.float32) + noise
    counts = {i: global_history.count(i) for i in set(global_history)}
    discount = jnp.asarray([counts.get(i, 0) / 10.0 for i in history_ids], jnp.float32)
    hist_weights = (base_mask * (1.0 - discount)).reshape(M_HIST, 1)

    item_embs = recipe_table[jnp.asarray(item_ids)]          # (N, D)
    hist_embs = recipe_table[jnp.asarray(history_ids)]       # (M, D)
    cat_emb = category_table[last_category - 1][None, :]     # (1, D)

    preds_list = [0.3, 0.7, 0.1]
    preds_list = preds_list + [0.0] * (EPISODE_LEN - len(preds_list))
    preds = jnp.asarray([preds_list], jnp.float32)           # (1, EPISODE_LEN)

    state = drr_state_representation(user_emb, item_embs, hist_embs, hist_weights,
                                     cat_emb, preds, state_flag_idx=9)
    state = jax.block_until_ready(state)
    state_ref = _drr_reference(user_emb, item_embs, hist_embs, hist_weights,
                               cat_emb, preds, state_flag_idx=9)
    assert state.shape == (1, N_ITEMS * D + M_HIST * D + D + EPISODE_LEN)
    assert jnp.allclose(state, state_ref, atol=2e-5, rtol=2e-5), "DRR state mismatch"

    # ------------------------------------------------------------------
    # Multi_CrossAttention submodule: hidden=100, all_head=100, heads=5.
    # ------------------------------------------------------------------
    B, S, hidden, all_head, heads = 2, 8, 100, 100, 5
    x = jax.random.normal(k_x, (B, S, hidden), jnp.float32)
    y = jax.random.normal(k_y, (B, S, hidden), jnp.float32)
    lim_h = 1.0 / math.sqrt(hidden)
    lim_a = 1.0 / math.sqrt(all_head)
    params = {
        "Wq": jax.random.uniform(k_q, (all_head, hidden), jnp.float32, -lim_h, lim_h),
        "Wk": jax.random.uniform(k_k, (all_head, hidden), jnp.float32, -lim_h, lim_h),
        "Wv": jax.random.uniform(k_v, (all_head, hidden), jnp.float32, -lim_h, lim_h),
        "Wo": jax.random.uniform(k_o, (hidden, all_head), jnp.float32, -lim_a, lim_a),
        "bo": jax.random.uniform(k_b, (hidden,), jnp.float32, -lim_a, lim_a),
    }
    attn_out = multi_cross_attention(x, y, params, num_heads=heads)
    attn_out = jax.block_until_ready(attn_out)
    attn_expected = _mca_reference(x, y, params, num_heads=heads)
    assert attn_out.shape == (B, S, hidden)
    assert jnp.allclose(attn_out, attn_expected, atol=2e-5, rtol=2e-5), \
        "Multi_CrossAttention mismatch"

    print("KERNEL_OK")
</pallas_src>

<mosaic_0001>
module attributes {stable_mosaic.version = 11 : i64} {
  func.func @_drr_state_kernel(%arg0: memref<1x128xf32, #tpu.memory_space<vmem>>, %arg1: memref<10x128xf32, #tpu.memory_space<vmem>>, %arg2: memref<10x128xf32, #tpu.memory_space<vmem>>, %arg3: memref<10x1xf32, #tpu.memory_space<vmem>>, %arg4: memref<1x128xf32, #tpu.memory_space<vmem>>, %arg5: memref<10x128xf32, #tpu.memory_space<vmem>>, %arg6: memref<10x128xf32, #tpu.memory_space<vmem>>, %arg7: memref<10x128xf32, #tpu.memory_space<vmem>>, %arg8: memref<1x128xf32, #tpu.memory_space<vmem>>) attributes {dimension_semantics = [], scalar_prefetch = 0 : i64, scratch_operands = 0 : i64, tpu.core_type = #tpu.core_type<tc>} {
    %c0 = arith.constant 0 : index
    %c0_0 = arith.constant 0 : index
    %0 = vector.load %arg0[%c0, %c0_0] : memref<1x128xf32, #tpu.memory_space<vmem>>, vector<1x128xf32>
    %c0_1 = arith.constant 0 : index
    %c0_2 = arith.constant 0 : index
    %1 = vector.load %arg1[%c0_1, %c0_2] : memref<10x128xf32, #tpu.memory_space<vmem>>, vector<10x128xf32>
    %2 = vector.broadcast %0 : vector<1x128xf32> to vector<10x128xf32>
    %3 = arith.mulf %2, %1 : vector<10x128xf32>
    %c0_3 = arith.constant 0 : index
    %c0_4 = arith.constant 0 : index
    %4 = vector.load %arg5[%c0_3, %c0_4] : memref<10x128xf32, #tpu.memory_space<vmem>>, vector<10x128xf32>
    tpu.vector_store %arg5[%c0_3, %c0_4], %3 {strides = array<i32>} : memref<10x128xf32, #tpu.memory_space<vmem>>, vector<10x128xf32>,
    %c0_5 = arith.constant 0 : index
    %c0_6 = arith.constant 0 : index
    %5 = vector.load %arg2[%c0_5, %c0_6] : memref<10x128xf32, #tpu.memory_space<vmem>>, vector<10x128xf32>
    %c0_7 = arith.constant 0 : index
    %c0_8 = arith.constant 0 : index
    %6 = vector.load %arg3[%c0_7, %c0_8] : memref<10x1xf32, #tpu.memory_space<vmem>>, vector<10x1xf32>
    %7 = vector.broadcast %6 : vector<10x1xf32> to vector<10x128xf32>
    %8 = arith.mulf %5, %7 : vector<10x128xf32>
    %c0_9 = arith.constant 0 : index
    %c0_10 = arith.constant 0 : index
    %9 = vector.load %arg6[%c0_9, %c0_10] : memref<10x128xf32, #tpu.memory_space<vmem>>, vector<10x128xf32>
    tpu.vector_store %arg6[%c0_9, %c0_10], %8 {strides = array<i32>} : memref<10x128xf32, #tpu.memory_space<vmem>>, vector<10x128xf32>,
    %cst = arith.constant dense<0.000000e+00> : vector<10x10xf32>
    %10 = tpu.matmul %8, %1, %cst {dimension_numbers = #tpu.dot_dimension_numbers<[1], [1], [0], [0], [0, 0, 1, 0], [], []>} : vector<10x128xf32>, vector<10x128xf32>, vector<10x10xf32> -> vector<10x10xf32>
    %cst_11 = arith.constant dense<0xFF800000> : vector<10xf32>
    %11 = vector.multi_reduction <maximumf>, %10, %cst_11 [1] : vector<10x10xf32> to vector<10xf32>
    %12 = vector.shape_cast %11 : vector<10xf32> to vector<10x1xf32>
    %13 = vector.broadcast %12 : vector<10x1xf32> to vector<10x10xf32>
    %14 = arith.subf %10, %13 : vector<10x10xf32>
    %15 = math.exp %14 : vector<10x10xf32>
    %cst_12 = arith.constant dense<0.000000e+00> : vector<10xf32>
    %16 = vector.multi_reduction <add>, %15, %cst_12 [1] : vector<10x10xf32> to vector<10xf32>
    %17 = vector.shape_cast %16 : vector<10xf32> to vector<10x1xf32>
    %18 = tpu.reciprocal %17 : vector<10x1xf32> -> vector<10x1xf32>
    %19 = vector.broadcast %18 : vector<10x1xf32> to vector<10x10xf32>
    %20 = arith.mulf %15, %19 : vector<10x10xf32>
    %cst_13 = arith.constant dense<0.000000e+00> : vector<10x128xf32>
    %21 = tpu.matmul %20, %1, %cst_13 {dimension_numbers = #tpu.dot_dimension_numbers<[1], [0], [0], [1], [0, 0, 1, 1], [], []>} : vector<10x10xf32>, vector<10x128xf32>, vector<10x128xf32> -> vector<10x128xf32>
    %c0_14 = arith.constant 0 : index
    %c0_15 = arith.constant 0 : index
    %22 = vector.load %arg7[%c0_14, %c0_15] : memref<10x128xf32, #tpu.memory_space<vmem>>, vector<10x128xf32>
    tpu.vector_store %arg7[%c0_14, %c0_15], %21 {strides = array<i32>} : memref<10x128xf32, #tpu.memory_space<vmem>>, vector<10x128xf32>,
    %c0_16 = arith.constant 0 : index
    %c0_17 = arith.constant 0 : index
    %23 = vector.load %arg4[%c0_16, %c0_17] : memref<1x128xf32, #tpu.memory_space<vmem>>, vector<1x128xf32>
    %24 = arith.mulf %0, %23 : vector<1x128xf32>
    %c0_18 = arith.constant 0 : index
    %c0_19 = arith.constant 0 : index
    %25 = vector.load %arg8[%c0_18, %c0_19] : memref<1x128xf32, #tpu.memory_space<vmem>>, vector<1x128xf32>
    tpu.vector_store %arg8[%c0_18, %c0_19], %24 {strides = array<i32>} : memref<1x128xf32, #tpu.memory_space<vmem>>, vector<1x128xf32>,
    return
  }
}

</mosaic_0001>

<llo_original>
// kernel: tpu_custom_call.1
$region0: #{tpu_custom_call.1}
  #allocation0 [shape = 'u32[]', space=smem, size = 0x4, offset = 0x4, fixed_abs, tag = 'smem constant byte address 0x4 - core index']
  #allocation1 [shape = 'u32[144,128]{1,0:T(1,128)}', space=vmem, size = 0x12000, scoped, tag = 'internal scratch']
  %s0 = inlined_call_operand.vmem [shape: f32[1,128], index: 0, kind: input, shape index: {}]
  %s1 = inlined_call_operand.vmem [shape: f32[10,128], index: 1, kind: input, shape index: {}]
  %s2 = inlined_call_operand.hbm [shape: f32[10,128], index: 2, kind: input, shape index: {}]
  %s3 = inlined_call_operand.vmem [shape: f32[10,1], index: 3, kind: input, shape index: {}]
  %s4 = inlined_call_operand.vmem [shape: f32[1,128], index: 4, kind: input, shape index: {}]
  %s5 = inlined_call_operand.hbm [shape: f32[10,128], index: 5, kind: output, shape index: {0}]
  %s6 = inlined_call_operand.hbm [shape: f32[10,128], index: 6, kind: output, shape index: {1}]
  %s7 = inlined_call_operand.hbm [shape: f32[10,128], index: 7, kind: output, shape index: {2}]
  %s8 = inlined_call_operand.hbm [shape: f32[1,128], index: 8, kind: output, shape index: {3}]
  %9 = xla_tuple %s5, %s6, %s7, %s8
  %s10 = sld [smem:[#allocation0]]
  $region58: #{tpu_custom_call.1} parent=0
    _
  %s12 = ssub.s32 1, %s10
  %s13 = scalar_select 0, %s12, %s10
  $region1: #{tpu_custom_call.1} parent=0
    #allocation2 [shape = 'u8[8192]{0}', space=vmem, size = 0x2000, scoped, tag = 'input window, operand 2, single buffered']
    #allocation3 [shape = 's32[1]{0}', space=sflag, size = 0x4, scoped, tag = 'scoped memory for tpu_custom_call.1']
    #allocation4 [shape = 's32[1]{0}', space=sflag, size = 0x4, scoped, tag = 'scoped memory for tpu_custom_call.1']
    #allocation5 [shape = 'u8[8192]{0}', space=vmem, size = 0x2000, scoped, tag = 'output window, operand 0, single buffered']
    #allocation6 [shape = 'u8[8192]{0}', space=vmem, size = 0x2000, scoped, tag = 'output window, operand 1, single buffered']
    #allocation7 [shape = 's32[1]{0}', space=sflag, size = 0x4, scoped, tag = 'scoped memory for tpu_custom_call.1']
    #allocation8 [shape = 'u8[8192]{0}', space=vmem, size = 0x2000, scoped, tag = 'output window, operand 2, single buffered']
    #allocation9 [shape = 'u8[512]{0}', space=vmem, size = 0x400, scoped, tag = 'output window, operand 3, single buffered']
    #allocation10 [shape = 's32[1]{0}', space=sflag, size = 0x4, scoped, tag = 'scoped memory for tpu_custom_call.1']
    %14 = vsyncpa [#allocation3], 0
    %15 = vsyncpa [#allocation4], 0
    %16 = vsyncpa [#allocation7], 0
    %17 = vsyncpa [#allocation10], 0
    // Predicated region
    $region2: #{tpu_custom_call.1} parent=1 // pred_check
      _
    $region3: #{tpu_custom_call.1} parent=1 // pred_check_branch
      %19 = sbr.rel (0) target = $region5
    $region4: #{tpu_custom_call.1} parent=1 // pred_region
      _
    $region5: #{tpu_custom_call.1} parent=1 // pred_fallthru
      _
    // Predicated region
    $region6: #{tpu_custom_call.1} parent=1 // pred_check
      _
    $region7: #{tpu_custom_call.1} parent=1 // pred_check_branch
      %21 = sbr.rel (0) target = $region9
    $region8: #{tpu_custom_call.1} parent=1 // pred_region
      _
    $region9: #{tpu_custom_call.1} parent=1 // pred_fallthru
      _
    // Predicated region
    $region10: #{tpu_custom_call.1} parent=1 // pred_check
      _
    $region11: #{tpu_custom_call.1} parent=1 // pred_check_branch
      %23 = sbr.rel (0) target = $region13
    $region12: #{tpu_custom_call.1} parent=1 // pred_region
      %s25 = ssub.s32 256, 256
      %26 = vsyncadd [#allocation3], %s25
      %s27 = sshll.u32 [#allocation2], 4
      %s28 = int_to_ptr.vmem [resolvable:$true] %s27
      %33 = dma.hbm_to_vmem [thread:$0]  %s2, 256, %s28, [#allocation3], 128, 128, 8
    $region13: #{tpu_custom_call.1} parent=1 // pred_fallthru
      _
    // Predicated region
    $region14: #{tpu_custom_call.1} parent=1 // pred_check
      _
    $region15: #{tpu_custom_call.1} parent=1 // pred_check_branch
      %35 = sbr.rel (0) target = $region17
    $region16: #{tpu_custom_call.1} parent=1 // pred_region
      _
    $region17: #{tpu_custom_call.1} parent=1 // pred_fallthru
      _
    // Predicated region
    $region18: #{tpu_custom_call.1} parent=1 // pred_check
      _
    $region19: #{tpu_custom_call.1} parent=1 // pred_check_branch
      %37 = sbr.rel (0) target = $region21
    $region20: #{tpu_custom_call.1} parent=1 // pred_region
      _
    $region21: #{tpu_custom_call.1} parent=1 // pred_fallthru
      _
    // Predicated region
    $region22: #{tpu_custom_call.1} parent=1 // pred_check
      _
    $region23: #{tpu_custom_call.1} parent=1 // pred_check_branch
      %39 = sbr.rel (0) target = $region25
    $region24: #{tpu_custom_call.1} parent=1 // pred_region
      %40 = dma.done [#allocation3], 256
    $region25: #{tpu_custom_call.1} parent=1 // pred_fallthru
      _
    %v41 = vld [vmem:[%s0] sm:$0x1]
    %v42 = vld [vmem:[%s1] sm:$0xff]
    %v43 = vld [vmem:[%s1 + $0x8] sm:$0x3]
    %v45 = vlaneseq
    %v46 = vshrl.u32 %v45, 7
    %v47 = vsub.s32 0, %v46
    %v48 = vrot.slane %v41, %v47
    %v50 = vmul.f32 %v48, %v42
    %v51 = vmul.f32 %v48, %v43
    %52 = vst [vmem:[#allocation5] sm:$0xff] %v50
    %53 = vst [vmem:[#allocation5 + $0x8] sm:$0x3] %v51
    %v54 = vld [vmem:[#allocation2] sm:$0xff]
    %v55 = vld [vmem:[#allocation2 + $0x8] sm:$0x3]
    %v56 = vld [vmem:[%s3] sm:$0xff]
    %v57 = vld [vmem:[%s3 + $0x8] sm:$0x3]
    %59 = vset.pattern.permute.xlu0 0
    %60 = vperm.xlu0 %59, %v56
    %v61 = vpop.permute.xlu0 %60
    %64 = vset.pattern.permute.xlu0 0
    %65 = vperm.xlu0 %64, %v57
    %v66 = vpop.permute.xlu0 %65
    %v68 = vmul.f32 %v54, %v61
    %v69 = vmul.f32 %v55, %v66
    %70 = vst [vmem:[#allocation6] sm:$0xff] %v68
    %71 = vst [vmem:[#allocation6 + $0x8] sm:$0x3] %v69
    %72 = vmatprep.subr.mxu0 0.0
    %73 = vmatpush1.xpose.msra.mxu0 %v42
    %74 = vmatprep.subr.mxu0 0.0
    %75 = vmatpush1.xpose.msra.mxu0 %v43
    %76 = vmatprep.subr.mxu0 0.0
    %77 = vmatpush1.xpose.msra.mxu0 0.0
    %78 = vmatprep.subr.mxu0 0.0
    %79 = vmatpush1.xpose.msra.mxu0 0.0
    %80 = vmatprep.subr.mxu0 0.0
    %81 = vmatpush1.xpose.msra.mxu0 0.0
    %82 = vmatprep.subr.mxu0 0.0
    %83 = vmatpush1.xpose.msra.mxu0 0.0
    %84 = vmatprep.subr.mxu0 0.0
    %85 = vmatpush1.xpose.msra.mxu0 0.0
    %86 = vmatprep.subr.mxu0 0.0
    %87 = vmatpush1.xpose.msra.mxu0 0.0
    %88 = vmatprep.subr.mxu0 0.0
    %89 = vmatpush1.xpose.msra.mxu0 0.0
    %90 = vmatprep.subr.mxu0 0.0
    %91 = vmatpush1.xpose.msra.mxu0 0.0
    %92 = vmatprep.subr.mxu0 0.0
    %93 = vmatpush1.xpose.msra.mxu0 0.0
    %94 = vmatprep.subr.mxu0 0.0
    %95 = vmatpush1.xpose.msra.mxu0 0.0
    %96 = vmatprep.subr.mxu0 0.0
    %97 = vmatpush1.xpose.msra.mxu0 0.0
    %98 = vmatprep.subr.mxu0 0.0
    %99 = vmatpush1.xpose.msra.mxu0 0.0
    %100 = vmatprep.subr.mxu0 0.0
    %101 = vmatpush1.xpose.msra.mxu0 0.0
    %102 = vmatprep.subr.mxu0 0.0
    %103 = vmatpush1.xpose.msra.mxu0 0.0
    %104 = vmatprep.subr.mxu0 0.0
    %105 = vmatpush1.xpose.msra.mxu0 0.0
    %106 = vmatprep.subr.mxu0 0.0
    %107 = vmatpush1.xpose.msra.mxu0 0.0
    %108 = vmatprep.subr.mxu0 0.0
    %109 = vmatpush1.xpose.msra.mxu0 0.0
    %110 = vmatprep.subr.mxu0 0.0
    %111 = vmatpush1.xpose.msra.mxu0 0.0
    %112 = vmatprep.subr.mxu0 0.0
    %113 = vmatpush1.xpose.msra.mxu0 0.0
    %114 = vmatprep.subr.mxu0 0.0
    %115 = vmatpush1.xpose.msra.mxu0 0.0
    %116 = vmatprep.subr.mxu0 0.0
    %117 = vmatpush1.xpose.msra.mxu0 0.0
    %118 = vmatprep.subr.mxu0 0.0
    %119 = vmatpush1.xpose.msra.mxu0 0.0
    %120 = vmatprep.subr.mxu0 0.0
    %121 = vmatpush1.xpose.msra.mxu0 0.0
    %122 = vmatprep.subr.mxu0 0.0
    %123 = vmatpush1.xpose.msra.mxu0 0.0
    %124 = vmatprep.subr.mxu0 0.0
    %125 = vmatpush1.xpose.msra.mxu0 0.0
    %126 = vmatprep.subr.mxu0 0.0
    %127 = vmatpush1.xpose.msra.mxu0 0.0
    %128 = vmatprep.subr.mxu0 0.0
    %129 = vmatpush1.xpose.msra.mxu0 0.0
    %130 = vmatprep.subr.mxu0 0.0
    %131 = vmatpush1.xpose.msra.mxu0 0.0
    %132 = vmatprep.subr.mxu0 0.0
    %133 = vmatpush1.xpose.msra.mxu0 0.0
    %134 = vmatprep.subr.mxu0 0.0
    %135 = vmatpush1.xpose.msra.mxu0 0.0
    %136 = vmatprep.mubr.f32.mxu0 0.0
    %137 = vmatmul.mubr.f32.gmra.mrb[0].mxu0 %v68
    %v138 = vpop.f32.mrb[0].mxu0
    %v139 = vadd.f32 0.0, %v138
    %v140 = vpop.f32.mrb[0].mxu0
    %141 = vmatprep.mubr.f32.mxu0 0.0
    %142 = vmatmul.mubr.f32.gmra.mrb[0].mxu0 %v69
    %v143 = vpop.f32.mrb[0].mxu0
    %v144 = vadd.f32 0.0, %v143
    %v145 = vpop.f32.mrb[0].mxu0
    %146 = vdwg.mxu0
    %vm147 = vcmask 80896
    %v148 = vsel %vm147, %v139, -inf
    %149 = vmax.xlane.f32.xlu0 %v148
    %v150 = vpop.xlane.xlu0 %149
    %vm151 = vcmask 74752
    %v152 = vsel %vm151, %v144, -inf
    %153 = vmax.xlane.f32.xlu0 %v152
    %v154 = vpop.xlane.xlu0 %153
    %v155 = vsub.f32 %v139, %v150
    %v156 = vsub.f32 %v144, %v154
    %v157 = vmul.f32 %v155, 1.442695
    %v158 = vpow.pop %v157
    %v159 = vmul.f32 %v156, 1.442695
    %v160 = vpow.pop %v159
    %v161 = vsel %vm147, %v158, 0.0
    %162 = vadd.xlane.f32.xlu0 %v161
    %v163 = vpop.xlane.xlu0 %162
    %v164 = vsel %vm151, %v160, 0.0
    %165 = vadd.xlane.f32.xlu0 %v164
    %v166 = vpop.xlane.xlu0 %165
    %v167 = vrcp.pop %v163
    %v168 = vrcp.pop %v166
    %v169 = vmul.f32 %v158, %v167
    %v170 = vmul.f32 %v160, %v168
    %v172 = vsel %vm147, %v169, 0
    %v175 = vsel %vm147, %v170, 0
    %vm177 = vcmask 1041408
    %v179 = vsel %vm177, %v43, 0
    %181 = vmatprep.subr.mxu0 0.0
    %182 = vmatpush1.msra.mxu0 %v42
    %183 = vmatprep.subr.mxu0 0.0
    %184 = vmatpush1.msra.mxu0 %v179
    %185 = vmatprep.subr.mxu0 0.0
    %186 = vmatpush1.msra.mxu0 0.0
    %187 = vmatprep.subr.mxu0 0.0
    %188 = vmatpush1.msra.mxu0 0.0
    %189 = vmatprep.subr.mxu0 0.0
    %190 = vmatpush1.msra.mxu0 0.0
    %191 = vmatprep.subr.mxu0 0.0
    %192 = vmatpush1.msra.mxu0 0.0
    %193 = vmatprep.subr.mxu0 0.0
    %194 = vmatpush1.msra.mxu0 0.0
    %195 = vmatprep.subr.mxu0 0.0
    %196 = vmatpush1.msra.mxu0 0.0
    %197 = vmatprep.subr.mxu0 0.0
    %198 = vmatpush1.msra.mxu0 0.0
    %199 = vmatprep.subr.mxu0 0.0
    %200 = vmatpush1.msra.mxu0 0.0
    %201 = vmatprep.subr.mxu0 0.0
    %202 = vmatpush1.msra.mxu0 0.0
    %203 = vmatprep.subr.mxu0 0.0
    %204 = vmatpush1.msra.mxu0 0.0
    %205 = vmatprep.subr.mxu0 0.0
    %206 = vmatpush1.msra.mxu0 0.0
    %207 = vmatprep.subr.mxu0 0.0
    %208 = vmatpush1.msra.mxu0 0.0
    %209 = vmatprep.subr.mxu0 0.0
    %210 = vmatpush1.msra.mxu0 0.0
    %211 = vmatprep.subr.mxu0 0.0
    %212 = vmatpush1.msra.mxu0 0.0
    %213 = vmatprep.subr.mxu0 0.0
    %214 = vmatpush1.msra.mxu0 0.0
    %215 = vmatprep.subr.mxu0 0.0
    %216 = vmatpush1.msra.mxu0 0.0
    %217 = vmatprep.subr.mxu0 0.0
    %218 = vmatpush1.msra.mxu0 0.0
    %219 = vmatprep.subr.mxu0 0.0
    %220 = vmatpush1.msra.mxu0 0.0
    %221 = vmatprep.subr.mxu0 0.0
    %222 = vmatpush1.msra.mxu0 0.0
    %223 = vmatprep.subr.mxu0 0.0
    %224 = vmatpush1.msra.mxu0 0.0
    %225 = vmatprep.subr.mxu0 0.0
    %226 = vmatpush1.msra.mxu0 0.0
    %227 = vmatprep.subr.mxu0 0.0
    %228 = vmatpush1.msra.mxu0 0.0
    %229 = vmatprep.subr.mxu0 0.0
    %230 = vmatpush1.msra.mxu0 0.0
    %231 = vmatprep.subr.mxu0 0.0
    %232 = vmatpush1.msra.mxu0 0.0
    %233 = vmatprep.subr.mxu0 0.0
    %234 = vmatpush1.msra.mxu0 0.0
    %235 = vmatprep.subr.mxu0 0.0
    %236 = vmatpush1.msra.mxu0 0.0
    %237 = vmatprep.subr.mxu0 0.0
    %238 = vmatpush1.msra.mxu0 0.0
    %239 = vmatprep.subr.mxu0 0.0
    %240 = vmatpush1.msra.mxu0 0.0
    %241 = vmatprep.subr.mxu0 0.0
    %242 = vmatpush1.msra.mxu0 0.0
    %243 = vmatprep.subr.mxu0 0.0
    %244 = vmatpush1.msra.mxu0 0.0
    %245 = vmatprep.mubr.f32.mxu0 0.0
    %246 = vmatmul.mubr.f32.gmra.mrb[0].mxu0 %v172
    %v247 = vpop.f32.mrb[0].mxu0
    %v248 = vadd.f32 0.0, %v247
    %v249 = vpop.f32.mrb[0].mxu0
    %250 = vmatprep.mubr.f32.mxu0 0.0
    %251 = vmatmul.mubr.f32.gmra.mrb[0].mxu0 %v175
    %v252 = vpop.f32.mrb[0].mxu0
    %v253 = vadd.f32 0.0, %v252
    %v254 = vpop.f32.mrb[0].mxu0
    %255 = vdwg.mxu0
    %256 = vst [vmem:[#allocation8] sm:$0xff] %v248
    %257 = vst [vmem:[#allocation8 + $0x8] sm:$0x3] %v253
    %v258 = vld [vmem:[%s4] sm:$0x1]
    %v259 = vmul.f32 %v41, %v258
    %260 = vst [vmem:[#allocation9] sm:$0x1] %v259
    // Predicated region
    $region26: #{tpu_custom_call.1} parent=1 // pred_check
      _
    $region27: #{tpu_custom_call.1} parent=1 // pred_check_branch
      %262 = sbr.rel (0) target = $region29
    $region28: #{tpu_custom_call.1} parent=1 // pred_region
      %s264 = ssub.s32 256, 256
      %265 = vsyncadd [#allocation4], %s264
      %s266 = sshll.u32 [#allocation5], 4
      %s267 = int_to_ptr.vmem [resolvable:$true] %s266
      %272 = dma.vmem_to_hbm [thread:$0]  %s267, 256, %s5, [#allocation4], 128, 128, 8
    $region29: #{tpu_custom_call.1} parent=1 // pred_fallthru
      _
    // Predicated region
    $region30: #{tpu_custom_call.1} parent=1 // pred_check
      _
    $region31: #{tpu_custom_call.1} parent=1 // pred_check_branch
      %274 = sbr.rel (0) target = $region33
    $region32: #{tpu_custom_call.1} parent=1 // pred_region
      %s276 = ssub.s32 256, 256
      %277 = vsyncadd [#allocation7], %s276
      %s278 = sshll.u32 [#allocation6], 4
      %s279 = int_to_ptr.vmem [resolvable:$true] %s278
      %284 = dma.vmem_to_hbm [thread:$0]  %s279, 256, %s6, [#allocation7], 128, 128, 8
    $region33: #{tpu_custom_call.1} parent=1 // pred_fallthru
      _
    // Predicated region
    $region34: #{tpu_custom_call.1} parent=1 // pred_check
      _
    $region35: #{tpu_custom_call.1} parent=1 // pred_check_branch
      %286 = sbr.rel (0) target = $region37
    $region36: #{tpu_custom_call.1} parent=1 // pred_region
      %s288 = ssub.s32 256, 256
      %289 = vsyncadd [#allocation7], %s288
      %s290 = sshll.u32 [#allocation8], 4
      %s291 = int_to_ptr.vmem [resolvable:$true] %s290
      %296 = dma.vmem_to_hbm [thread:$0]  %s291, 256, %s7, [#allocation7], 128, 128, 8
    $region37: #{tpu_custom_call.1} parent=1 // pred_fallthru
      _
    // Predicated region
    $region38: #{tpu_custom_call.1} parent=1 // pred_check
      _
    $region39: #{tpu_custom_call.1} parent=1 // pred_check_branch
      %298 = sbr.rel (0) target = $region41
    $region40: #{tpu_custom_call.1} parent=1 // pred_region
      %s300 = ssub.s32 16, 16
      %301 = vsyncadd [#allocation10], %s300
      %s303 = sshll.u32 [#allocation9], 4
      %s304 = int_to_ptr.vmem [resolvable:$true] %s303
      %306 = dma.vmem_to_hbm [thread:$0]  %s304, 16, %s8, [#allocation10]
    $region41: #{tpu_custom_call.1} parent=1 // pred_fallthru
      _
    // Predicated region
    $region42: #{tpu_custom_call.1} parent=1 // pred_check
      _
    $region43: #{tpu_custom_call.1} parent=1 // pred_check_branch
      %308 = sbr.rel (0) target = $region45
    $region44: #{tpu_custom_call.1} parent=1 // pred_region
      %309 = dma.done [#allocation4], 256
    $region45: #{tpu_custom_call.1} parent=1 // pred_fallthru
      _
    // Predicated region
    $region46: #{tpu_custom_call.1} parent=1 // pred_check
      _
    $region47: #{tpu_custom_call.1} parent=1 // pred_check_branch
      %311 = sbr.rel (0) target = $region49
    $region48: #{tpu_custom_call.1} parent=1 // pred_region
      %312 = dma.done [#allocation7], 256
    $region49: #{tpu_custom_call.1} parent=1 // pred_fallthru
      _
    // Predicated region
    $region50: #{tpu_custom_call.1} parent=1 // pred_check
      _
    $region51: #{tpu_custom_call.1} parent=1 // pred_check_branch
      %314 = sbr.rel (0) target = $region53
    $region52: #{tpu_custom_call.1} parent=1 // pred_region
      %315 = dma.done [#allocation7], 256
    $region53: #{tpu_custom_call.1} parent=1 // pred_fallthru
      _
    // Predicated region
    $region54: #{tpu_custom_call.1} parent=1 // pred_check
      _
    $region55: #{tpu_custom_call.1} parent=1 // pred_check_branch
      %317 = sbr.rel (0) target = $region57
    $region56: #{tpu_custom_call.1} parent=1 // pred_region
      %318 = dma.done [#allocation10], 16
    $region57: #{tpu_custom_call.1} parent=1 // pred_fallthru
      _
    %319 = vsyncpa [#allocation3], 1
    %320 = vsyncpa [#allocation4], 1
    %321 = vsyncpa [#allocation7], 1
    %322 = vsyncpa [#allocation10], 1

</llo_original>
